<compile_context>
chip_gen: v7x
topology: tpu7x:2x2x1
jax: 0.10.0
libtpu: 0.0.40
codegen_flags: <defaults>
</compile_context>

<pallas_src>
import jax
import jax.numpy as jnp
from jax import lax
from jax.experimental import pallas as pl
from jax.experimental.pallas import tpu as pltpu

_LANES = 128
_SUBLANES = 8


def depth_loss(pred, label, *, block_rows=4096):
    """JAX/Pallas equivalent of Depth_Loss.forward(pred, label).

    pred, label: (N, 1, H, W) arrays. Returns a scalar float32 loss.
    """
    n, c, h, w = pred.shape
    assert c == 1
    total = n * h * w

    p = pred.reshape(-1)
    l = label.reshape(-1)

    # Only pad (one HBM copy) when the flat size is not (8,128)-aligned.
    # Pad values are zero -> adiff == 0 -> identity for both max and sum.
    align = _SUBLANES * _LANES
    pad = (-total) % align
    if pad:
        p = jnp.pad(p, (0, pad))
        l = jnp.pad(l, (0, pad))
    rows = (total + pad) // _LANES          # multiple of 8
    p2 = p.reshape(rows, _LANES)
    l2 = l.reshape(rows, _LANES)

    # Tile / grid geometry.
    block_rows = max(_SUBLANES, (block_rows // _SUBLANES) * _SUBLANES)
    br = min(block_rows, rows)                        # multiple of 8
    num_blocks = -(-rows // br)
    num_slices = 2 if num_blocks >= 2 else 1          # megacore split (v7x)
    steps = -(-num_blocks // num_slices)

    ragged = (rows % br) != 0                         # edge block reads undefined rows
    overhang = num_slices * steps * br > rows         # ragged edge OR duplicated tail

    grid = (num_slices, steps)
    tile_spec = pl.BlockSpec(
        (br, _LANES),
        # Clamp so the DMA'd block index is always in bounds; duplicated tail
        # blocks are neutralized by the in-kernel row mask (sum pass).
        lambda s, t: (jnp.minimum(s * steps + t, num_blocks - 1), 0))
    out_spec = pl.BlockSpec((_SUBLANES, _LANES), lambda s, t: (s, 0))
    out_shape = jax.ShapeDtypeStruct((num_slices * _SUBLANES, _LANES),
                                     jnp.float32)
    scratch = [pltpu.VMEM((br, _LANES), jnp.float32)]
    cparams = pltpu.CompilerParams(
        dimension_semantics=("parallel", "arbitrary"))

    def _abs_diff(p_ref, l_ref, mask):
        adiff = jnp.abs(p_ref[...].astype(jnp.float32) -
                        l_ref[...].astype(jnp.float32))
        if mask:
            blk = pl.program_id(0) * steps + pl.program_id(1)
            rid = blk * br + lax.broadcasted_iota(jnp.int32, (br, _LANES), 0)
            adiff = jnp.where(rid < rows, adiff, 0.0)   # identity for max & sum
        return adiff

    # ---- pass 1: per-(sublane, lane) partial maxima of |pred - label| ----
    def max_kernel(p_ref, l_ref, out_ref, acc_ref):
        t = pl.program_id(1)

        @pl.when(t == 0)
        def _():
            acc_ref[...] = jnp.zeros_like(acc_ref)       # adiff >= 0

        # Duplicated tail blocks are idempotent under max -> mask only if the
        # edge block is ragged (would otherwise read undefined VMEM rows).
        acc_ref[...] = jnp.maximum(acc_ref[...], _abs_diff(p_ref, l_ref, ragged))

        @pl.when(t == pl.num_programs(1) - 1)
        def _():
            col = jnp.max(acc_ref[...], axis=0, keepdims=True)   # (1, 128)
            out_ref[...] = jnp.broadcast_to(col, (_SUBLANES, _LANES))

    part_max = pl.pallas_call(
        max_kernel,
        out_shape=out_shape,
        grid=grid,
        in_specs=[tile_spec, tile_spec],
        out_specs=out_spec,
        scratch_shapes=scratch,
        compiler_params=cparams,
    )(p2, l2)

    max_adiff = jnp.max(part_max)
    bm = jnp.float32(0.2) * max_adiff
    # Hoist the per-element constants once; consumed from SMEM in pass 2.
    scalars = jnp.stack([bm, bm * bm, jnp.float32(0.5) / bm]).astype(jnp.float32)

    # ---- pass 2: berHu transform + per-(sublane, lane) partial sums ----
    def berhu_kernel(sc_ref, p_ref, l_ref, out_ref, acc_ref):
        t = pl.program_id(1)

        @pl.when(t == 0)
        def _():
            acc_ref[...] = jnp.zeros_like(acc_ref)

        adiff = _abs_diff(p_ref, l_ref, overhang)
        bm_s = sc_ref[0]
        bm_sq = sc_ref[1]
        inv_2bm = sc_ref[2]
        acc_ref[...] += jnp.where(adiff <= bm_s, adiff,
                                  (adiff * adiff + bm_sq) * inv_2bm)

        @pl.when(t == pl.num_programs(1) - 1)
        def _():
            col = jnp.sum(acc_ref[...], axis=0, keepdims=True)   # (1, 128)
            out_ref[...] = jnp.broadcast_to(col, (_SUBLANES, _LANES))

    part_sum = pl.pallas_call(
        berhu_kernel,
        out_shape=out_shape,
        grid=grid,
        in_specs=[pl.BlockSpec(memory_space=pltpu.MemorySpace.SMEM),
                  tile_spec, tile_spec],
        out_specs=out_spec,
        scratch_shapes=scratch,
        compiler_params=cparams,
    )(scalars, p2, l2)

    # Every row inside a slice's (8,128) partial is identical -> take row 0 of
    # each slice for the sum; the max is invariant to the duplication.
    total_sum = jnp.sum(part_sum[::_SUBLANES])
    return (total_sum / jnp.float32(total)).astype(jnp.float32)


def _reference_depth_loss(pred, label):
    """Pure-JAX reference mirroring the PyTorch forward."""
    pred = jnp.squeeze(pred).astype(jnp.float32)
    label = jnp.squeeze(label).astype(jnp.float32)
    adiff = jnp.abs(pred - label)
    batch_max = 0.2 * jnp.max(adiff)
    t1_mask = (adiff <= batch_max).astype(jnp.float32)
    t2_mask = (adiff > batch_max).astype(jnp.float32)
    t1 = adiff * t1_mask
    t2 = (adiff * adiff + batch_max * batch_max) / (2.0 * batch_max) * t2_mask
    return (jnp.sum(t1) + jnp.sum(t2)) / pred.size


if __name__ == "__main__":
    key = jax.random.PRNGKey(0)
    k1, k2 = jax.random.split(key)
    n, c, h, w = 2, 1, 16, 16
    pred = jax.random.uniform(k1, (n, c, h, w), dtype=jnp.float32) * 10.0
    label = jax.random.uniform(k2, (n, c, h, w), dtype=jnp.float32) * 10.0

    loss = jax.jit(depth_loss)(pred, label)
    loss = jax.block_until_ready(loss)

    ref = _reference_depth_loss(pred, label)
    assert jnp.allclose(loss, ref, rtol=1e-5, atol=1e-5), (loss, ref)
    print("KERNEL_OK")
</pallas_src>

<mosaic_0001>
module attributes {stable_mosaic.version = 11 : i64} {
  func.func @max_kernel(%arg0: i32, %arg1: i32, %arg2: memref<8x128xf32, #tpu.memory_space<vmem>>, %arg3: memref<8x128xf32, #tpu.memory_space<vmem>>, %arg4: memref<8x128xf32, #tpu.memory_space<vmem>>, %arg5: memref<8x128xf32, #tpu.memory_space<vmem>>) attributes {dimension_semantics = [#tpu.dimension_semantics<parallel>, #tpu.dimension_semantics<arbitrary>], iteration_bounds = array<i64: 1, 1>, scalar_prefetch = 0 : i64, scratch_operands = 1 : i64, tpu.core_type = #tpu.core_type<tc>, window_params = [{transform_indices = @transform_0, window_bounds = array<i64: 8, 128>}, {transform_indices = @transform_1, window_bounds = array<i64: 8, 128>}, {transform_indices = @transform_2, window_bounds = array<i64: 8, 128>}]} {
    %c0_i32 = arith.constant 0 : i32
    %0 = arith.cmpi eq, %arg1, %c0_i32 : i32
    %1 = arith.extui %0 : i1 to i32
    %c0_i32_0 = arith.constant 0 : i32
    %2 = arith.cmpi ne, %1, %c0_i32_0 : i32
    scf.if %2 {
      %cst = arith.constant 0.000000e+00 : f32
      %13 = vector.broadcast %cst : f32 to vector<8x128xf32>
      %c0_10 = arith.constant 0 : index
      %c0_11 = arith.constant 0 : index
      %14 = vector.load %arg5[%c0_10, %c0_11] : memref<8x128xf32, #tpu.memory_space<vmem>>, vector<8x128xf32>
      tpu.vector_store %arg5[%c0_10, %c0_11], %13 {strides = array<i32>} : memref<8x128xf32, #tpu.memory_space<vmem>>, vector<8x128xf32>,
    } else {
    }
    %c0 = arith.constant 0 : index
    %c0_1 = arith.constant 0 : index
    %3 = vector.load %arg5[%c0, %c0_1] : memref<8x128xf32, #tpu.memory_space<vmem>>, vector<8x128xf32>
    %c0_2 = arith.constant 0 : index
    %c0_3 = arith.constant 0 : index
    %4 = vector.load %arg2[%c0_2, %c0_3] : memref<8x128xf32, #tpu.memory_space<vmem>>, vector<8x128xf32>
    %c0_4 = arith.constant 0 : index
    %c0_5 = arith.constant 0 : index
    %5 = vector.load %arg3[%c0_4, %c0_5] : memref<8x128xf32, #tpu.memory_space<vmem>>, vector<8x128xf32>
    %6 = arith.subf %4, %5 : vector<8x128xf32>
    %7 = math.absf %6 : vector<8x128xf32>
    %8 = arith.maximumf %3, %7 : vector<8x128xf32>
    %c0_6 = arith.constant 0 : index
    %c0_7 = arith.constant 0 : index
    %9 = vector.load %arg5[%c0_6, %c0_7] : memref<8x128xf32, #tpu.memory_space<vmem>>, vector<8x128xf32>
    tpu.vector_store %arg5[%c0_6, %c0_7], %8 {strides = array<i32>} : memref<8x128xf32, #tpu.memory_space<vmem>>, vector<8x128xf32>,
    %c0_i32_8 = arith.constant 0 : i32
    %10 = arith.cmpi eq, %arg1, %c0_i32_8 : i32
    %11 = arith.extui %10 : i1 to i32
    %c0_i32_9 = arith.constant 0 : i32
    %12 = arith.cmpi ne, %11, %c0_i32_9 : i32
    scf.if %12 {
      %c0_10 = arith.constant 0 : index
      %c0_11 = arith.constant 0 : index
      %13 = vector.load %arg5[%c0_10, %c0_11] : memref<8x128xf32, #tpu.memory_space<vmem>>, vector<8x128xf32>
      %cst = arith.constant dense<0xFF800000> : vector<128xf32>
      %14 = vector.multi_reduction <maximumf>, %13, %cst [0] : vector<8x128xf32> to vector<128xf32>
      %15 = vector.shape_cast %14 : vector<128xf32> to vector<1x128xf32>
      %16 = vector.shape_cast %15 : vector<1x128xf32> to vector<1x128xf32>
      %17 = vector.broadcast %16 : vector<1x128xf32> to vector<8x128xf32>
      %c0_12 = arith.constant 0 : index
      %c0_13 = arith.constant 0 : index
      %18 = vector.load %arg4[%c0_12, %c0_13] : memref<8x128xf32, #tpu.memory_space<vmem>>, vector<8x128xf32>
      tpu.vector_store %arg4[%c0_12, %c0_13], %17 {strides = array<i32>} : memref<8x128xf32, #tpu.memory_space<vmem>>, vector<8x128xf32>,
    } else {
    }
    return
  }
  func.func @transform_0(%arg0: i32, %arg1: i32) -> (i32, i32) {
    %c1_i32 = arith.constant 1 : i32
    %0 = arith.muli %arg0, %c1_i32 : i32
    %1 = arith.addi %0, %arg1 : i32
    %c0_i32 = arith.constant 0 : i32
    %2 = arith.minsi %1, %c0_i32 : i32
    %c0_i32_0 = arith.constant 0 : i32
    %c0_i32_1 = arith.constant 0 : i32
    return %2, %c0_i32_0 : i32, i32
  }
  func.func @transform_1(%arg0: i32, %arg1: i32) -> (i32, i32) {
    %c1_i32 = arith.constant 1 : i32
    %0 = arith.muli %arg0, %c1_i32 : i32
    %1 = arith.addi %0, %arg1 : i32
    %c0_i32 = arith.constant 0 : i32
    %2 = arith.minsi %1, %c0_i32 : i32
    %c0_i32_0 = arith.constant 0 : i32
    %c0_i32_1 = arith.constant 0 : i32
    return %2, %c0_i32_0 : i32, i32
  }
  func.func @transform_2(%arg0: i32, %arg1: i32) -> (i32, i32) {
    %c0_i32 = arith.constant 0 : i32
    %c0_i32_0 = arith.constant 0 : i32
    return %arg0, %c0_i32 : i32, i32
  }
}

module attributes {stable_mosaic.version = 11 : i64} {
  func.func @berhu_kernel(%arg0: i32, %arg1: i32, %arg2: memref<3xf32, #tpu.memory_space<smem>>, %arg3: memref<8x128xf32, #tpu.memory_space<vmem>>, %arg4: memref<8x128xf32, #tpu.memory_space<vmem>>, %arg5: memref<8x128xf32, #tpu.memory_space<vmem>>, %arg6: memref<8x128xf32, #tpu.memory_space<vmem>>) attributes {dimension_semantics = [#tpu.dimension_semantics<parallel>, #tpu.dimension_semantics<arbitrary>], iteration_bounds = array<i64: 1, 1>, scalar_prefetch = 0 : i64, scratch_operands = 1 : i64, tpu.core_type = #tpu.core_type<tc>, window_params = [{transform_indices = @transform_0, window_bounds = array<i64: 3>}, {transform_indices = @transform_1, window_bounds = array<i64: 8, 128>}, {transform_indices = @transform_2, window_bounds = array<i64: 8, 128>}, {transform_indices = @transform_3, window_bounds = array<i64: 8, 128>}]} {
    %c0_i32 = arith.constant 0 : i32
    %0 = arith.cmpi eq, %arg1, %c0_i32 : i32
    %1 = arith.extui %0 : i1 to i32
    %c0_i32_0 = arith.constant 0 : i32
    %2 = arith.cmpi ne, %1, %c0_i32_0 : i32
    scf.if %2 {
      %cst = arith.constant 0.000000e+00 : f32
      %24 = vector.broadcast %cst : f32 to vector<8x128xf32>
      %c0_11 = arith.constant 0 : index
      %c0_12 = arith.constant 0 : index
      %25 = vector.load %arg6[%c0_11, %c0_12] : memref<8x128xf32, #tpu.memory_space<vmem>>, vector<8x128xf32>
      tpu.vector_store %arg6[%c0_11, %c0_12], %24 {strides = array<i32>} : memref<8x128xf32, #tpu.memory_space<vmem>>, vector<8x128xf32>,
    } else {
    }
    %c0 = arith.constant 0 : index
    %c0_1 = arith.constant 0 : index
    %3 = vector.load %arg3[%c0, %c0_1] : memref<8x128xf32, #tpu.memory_space<vmem>>, vector<8x128xf32>
    %c0_2 = arith.constant 0 : index
    %c0_3 = arith.constant 0 : index
    %4 = vector.load %arg4[%c0_2, %c0_3] : memref<8x128xf32, #tpu.memory_space<vmem>>, vector<8x128xf32>
    %5 = arith.subf %3, %4 : vector<8x128xf32>
    %6 = math.absf %5 : vector<8x128xf32>
    %c0_4 = arith.constant 0 : index
    %7 = memref.load %arg2[%c0_4] : memref<3xf32, #tpu.memory_space<smem>>
    %c1 = arith.constant 1 : index
    %8 = memref.load %arg2[%c1] : memref<3xf32, #tpu.memory_space<smem>>
    %c2 = arith.constant 2 : index
    %9 = memref.load %arg2[%c2] : memref<3xf32, #tpu.memory_space<smem>>
    %c0_5 = arith.constant 0 : index
    %c0_6 = arith.constant 0 : index
    %10 = vector.load %arg6[%c0_5, %c0_6] : memref<8x128xf32, #tpu.memory_space<vmem>>, vector<8x128xf32>
    %11 = vector.broadcast %7 : f32 to vector<8x128xf32>
    %12 = arith.cmpf ole, %6, %11 : vector<8x128xf32>
    %13 = arith.mulf %6, %6 : vector<8x128xf32>
    %14 = vector.broadcast %8 : f32 to vector<8x128xf32>
    %15 = arith.addf %13, %14 : vector<8x128xf32>
    %16 = vector.broadcast %9 : f32 to vector<8x128xf32>
    %17 = arith.mulf %15, %16 : vector<8x128xf32>
    %18 = arith.select %12, %6, %17 : vector<8x128xi1>, vector<8x128xf32>
    %19 = arith.addf %10, %18 : vector<8x128xf32>
    %c0_7 = arith.constant 0 : index
    %c0_8 = arith.constant 0 : index
    %20 = vector.load %arg6[%c0_7, %c0_8] : memref<8x128xf32, #tpu.memory_space<vmem>>, vector<8x128xf32>
    tpu.vector_store %arg6[%c0_7, %c0_8], %19 {strides = array<i32>} : memref<8x128xf32, #tpu.memory_space<vmem>>, vector<8x128xf32>,
    %c0_i32_9 = arith.constant 0 : i32
    %21 = arith.cmpi eq, %arg1, %c0_i32_9 : i32
    %22 = arith.extui %21 : i1 to i32
    %c0_i32_10 = arith.constant 0 : i32
    %23 = arith.cmpi ne, %22, %c0_i32_10 : i32
    scf.if %23 {
      %c0_11 = arith.constant 0 : index
      %c0_12 = arith.constant 0 : index
      %24 = vector.load %arg6[%c0_11, %c0_12] : memref<8x128xf32, #tpu.memory_space<vmem>>, vector<8x128xf32>
      %cst = arith.constant dense<0.000000e+00> : vector<128xf32>
      %25 = vector.multi_reduction <add>, %24, %cst [0] : vector<8x128xf32> to vector<128xf32>
      %26 = vector.shape_cast %25 : vector<128xf32> to vector<1x128xf32>
      %27 = vector.shape_cast %26 : vector<1x128xf32> to vector<1x128xf32>
      %28 = vector.broadcast %27 : vector<1x128xf32> to vector<8x128xf32>
      %c0_13 = arith.constant 0 : index
      %c0_14 = arith.constant 0 : index
      %29 = vector.load %arg5[%c0_13, %c0_14] : memref<8x128xf32, #tpu.memory_space<vmem>>, vector<8x128xf32>
      tpu.vector_store %arg5[%c0_13, %c0_14], %28 {strides = array<i32>} : memref<8x128xf32, #tpu.memory_space<vmem>>, vector<8x128xf32>,
    } else {
    }
    return
  }
  func.func @transform_0(%arg0: i32, %arg1: i32) -> i32 {
    %c0_i32 = arith.constant 0 : i32
    %c0_i32_0 = arith.constant 0 : i32
    return %c0_i32 : i32
  }
  func.func @transform_1(%arg0: i32, %arg1: i32) -> (i32, i32) {
    %c1_i32 = arith.constant 1 : i32
    %0 = arith.muli %arg0, %c1_i32 : i32
    %1 = arith.addi %0, %arg1 : i32
    %c0_i32 = arith.constant 0 : i32
    %2 = arith.minsi %1, %c0_i32 : i32
    %c0_i32_0 = arith.constant 0 : i32
    %c0_i32_1 = arith.constant 0 : i32
    return %2, %c0_i32_0 : i32, i32
  }
  func.func @transform_2(%arg0: i32, %arg1: i32) -> (i32, i32) {
    %c1_i32 = arith.constant 1 : i32
    %0 = arith.muli %arg0, %c1_i32 : i32
    %1 = arith.addi %0, %arg1 : i32
    %c0_i32 = arith.constant 0 : i32
    %2 = arith.minsi %1, %c0_i32 : i32
    %c0_i32_0 = arith.constant 0 : i32
    %c0_i32_1 = arith.constant 0 : i32
    return %2, %c0_i32_0 : i32, i32
  }
  func.func @transform_3(%arg0: i32, %arg1: i32) -> (i32, i32) {
    %c0_i32 = arith.constant 0 : i32
    %c0_i32_0 = arith.constant 0 : i32
    return %arg0, %c0_i32 : i32, i32
  }
}

</mosaic_0001>

<llo_original>
// kernel: depth_loss.2
$region0: #{depth_loss.2}
  #allocation0 [shape = 'u32[]', space=smem, size = 0x4, offset = 0x4, fixed_abs, tag = 'smem constant byte address 0x4 - core index']
  #allocation1 [shape = 'u32[144,128]{1,0:T(1,128)}', space=vmem, size = 0x12000, scoped, tag = 'internal scratch']
  #allocation2 [shape = 'f32[8,128]{1,0:T(8,128)}', space=vmem, size = 0x1000, scoped, tag = 'scratch operand']
  %s0 = inlined_call_operand.vmem [shape: f32[8,128], index: 0, kind: input, shape index: {}]
  %s1 = inlined_call_operand.vmem [shape: f32[8,128], index: 1, kind: input, shape index: {}]
  %s2 = inlined_call_operand.vmem [shape: f32[8,128], index: 2, kind: output, shape index: {}]
  %s3 = sld [smem:[#allocation0]]
  $region26: #{depth_loss.2} parent=0
    _
  %s5 = ssub.s32 1, %s3
  %s6 = scalar_select 0, %s5, %s3
  // Predicated region
  $region2: #{depth_loss.2} parent=0 // pred_check
    _
  $region3: #{depth_loss.2} parent=0 // pred_check_branch
    %8 = sbr.rel (0) target = $region5
  $region4: #{depth_loss.2} parent=0 // pred_region
    %s9 = sadd.s32 0, 0
    %p10 = scmp.lt.s32.totalorder %s9, 0
    %s11 = scalar_select %p10, %s9, 0
    %p12 = scmp.lt.s32.totalorder %s11, 0
    %s13 = scalar_select %p12, %s11, 0
    %s14 = smul.addr %s13, 8
    %s15 = scalar_lea.vmem %s0, %s14
    %s16 = sadd.s32 0, 0
    %p17 = scmp.lt.s32.totalorder %s16, 0
    %s18 = scalar_select %p17, %s16, 0
  $region5: #{depth_loss.2} parent=0 // pred_fallthru
    _
  // Predicated region
  $region6: #{depth_loss.2} parent=0 // pred_check
    _
  $region7: #{depth_loss.2} parent=0 // pred_check_branch
    %20 = sbr.rel (0) target = $region9
  $region8: #{depth_loss.2} parent=0 // pred_region
    %s21 = sadd.s32 0, 0
    %p22 = scmp.lt.s32.totalorder %s21, 0
    %s23 = scalar_select %p22, %s21, 0
    %p24 = scmp.lt.s32.totalorder %s23, 0
    %s25 = scalar_select %p24, %s23, 0
    %s26 = smul.addr %s25, 8
    %s27 = scalar_lea.vmem %s1, %s26
    %s28 = sadd.s32 0, 0
    %p29 = scmp.lt.s32.totalorder %s28, 0
    %s30 = scalar_select %p29, %s28, 0
  $region9: #{depth_loss.2} parent=0 // pred_fallthru
    _
  %s31 = sadd.s32 0, 0
  %p32 = scmp.lt.s32.totalorder %s31, 0
  %s33 = scalar_select %p32, %s31, 0
  %p34 = scmp.lt.s32.totalorder %s33, 0
  %s35 = scalar_select %p34, %s33, 0
  %s36 = smul.addr %s35, 8
  %s37 = scalar_lea.vmem %s0, %s36
  %s38 = sadd.s32 0, 0
  %p39 = scmp.lt.s32.totalorder %s38, 0
  %s40 = scalar_select %p39, %s38, 0
  %p41 = scmp.lt.s32.totalorder %s40, 0
  %s42 = scalar_select %p41, %s40, 0
  %s43 = smul.addr %s42, 8
  %s44 = scalar_lea.vmem %s1, %s43
  %s45 = sadd.s32 0, 0
  %p46 = scmp.lt.s32.totalorder %s45, 0
  %s47 = scalar_select %p46, %s45, 0
  %p48 = scmp.lt.s32.totalorder %s47, 0
  %s49 = scalar_select %p48, %s47, 0
  %s50 = smul.addr %s49, 8
  %s51 = scalar_lea.vmem %s0, %s50
  %s52 = sadd.s32 0, 0
  %p53 = scmp.lt.s32.totalorder %s52, 0
  %s54 = scalar_select %p53, %s52, 0
  %s55 = sadd.s32 0, 0
  %p56 = scmp.lt.s32.totalorder %s55, 0
  %s57 = scalar_select %p56, %s55, 0
  %p58 = scmp.lt.s32.totalorder %s57, 0
  %s59 = scalar_select %p58, %s57, 0
  %s60 = smul.addr %s59, 8
  %s61 = scalar_lea.vmem %s1, %s60
  %s62 = sadd.s32 0, 0
  %p63 = scmp.lt.s32.totalorder %s62, 0
  %s64 = scalar_select %p63, %s62, 0
  %p65 = scmp.eq.s32.totalorder 0, 0
  // Predicated region
  $region10: #{depth_loss.2} parent=0 // pred_check
    %p66 = pneg %p65
  $region11: #{depth_loss.2} parent=0 // pred_check_branch
    %68 = sbr.rel (%p66) target = $region13
  $region12: #{depth_loss.2} parent=0 // pred_region
    %69 = vst [vmem:[#allocation2] sm:$0xff] 0.0
  $region13: #{depth_loss.2} parent=0 // pred_fallthru
    _
  %v70 = vld [vmem:[#allocation2] sm:$0xff]
  %v71 = vld [vmem:[%s51] sm:$0xff]
  %v72 = vld [vmem:[%s61] sm:$0xff]
  %v73 = vsub.f32 %v71, %v72
  %v74 = vand.u32 2147483647, %v73
  %v75 = vmax.f32 %v70, %v74
  %76 = vst [vmem:[#allocation2] sm:$0xff] %v75
  // Predicated region
  $region14: #{depth_loss.2} parent=0 // pred_check
    %p77 = pneg %p65
  $region15: #{depth_loss.2} parent=0 // pred_check_branch
    %79 = sbr.rel (%p77) target = $region17
  $region16: #{depth_loss.2} parent=0 // pred_region
    %v80 = vld [vmem:[#allocation2] sm:$0xff]
    %v81 = vrot.slane %v80, 4
    %v82 = vmax.f32 %v80, %v81
    %v83 = vrot.slane %v82, 2
    %v84 = vmax.f32 %v82, %v83
    %v85 = vrot.slane %v84, 1
    %v86 = vmax.f32 %v84, %v85
    %87 = vst [vmem:[%s2] sm:$0xff] %v86
  $region17: #{depth_loss.2} parent=0 // pred_fallthru
    _
  // Predicated region
  $region18: #{depth_loss.2} parent=0 // pred_check
    _
  $region19: #{depth_loss.2} parent=0 // pred_check_branch
    %89 = sbr.rel (0) target = $region21
  $region20: #{depth_loss.2} parent=0 // pred_region
    _
  $region21: #{depth_loss.2} parent=0 // pred_fallthru
    _
  // Predicated region
  $region22: #{depth_loss.2} parent=0 // pred_check
    _
  $region23: #{depth_loss.2} parent=0 // pred_check_branch
    %91 = sbr.rel (0) target = $region25
  $region24: #{depth_loss.2} parent=0 // pred_region
    _
  $region25: #{depth_loss.2} parent=0 // pred_fallthru
    _

// kernel: depth_loss.3
$region0: #{depth_loss.3}
  #allocation0 [shape = 'u32[]', space=smem, size = 0x4, offset = 0x4, fixed_abs, tag = 'smem constant byte address 0x4 - core index']
  #allocation1 [shape = 'u32[144,128]{1,0:T(1,128)}', space=vmem, size = 0x12000, scoped, tag = 'internal scratch']
  #allocation2 [shape = 'f32[8,128]{1,0:T(8,128)}', space=vmem, size = 0x1000, scoped, tag = 'scratch operand']
  %s0 = inlined_call_operand.vmem [shape: f32[3], index: 0, kind: input, shape index: {}]
  %s1 = inlined_call_operand.vmem [shape: f32[8,128], index: 1, kind: input, shape index: {}]
  %s2 = inlined_call_operand.vmem [shape: f32[8,128], index: 2, kind: input, shape index: {}]
  %s3 = inlined_call_operand.vmem [shape: f32[8,128], index: 3, kind: output, shape index: {}]
  %s4 = sld [smem:[#allocation0]]
  $region34: #{depth_loss.3} parent=0
    _
  %s6 = ssub.s32 1, %s4
  %s7 = scalar_select 0, %s6, %s4
  $region1: #{depth_loss.3} parent=0
    #allocation3 [shape = 'u8[512]{0}', space=smem, size = 0x200, scoped, tag = 'input window, operand 0, single buffered']
    #allocation4 [shape = 's32[1]{0}', space=sflag, size = 0x4, scoped, tag = 'scoped memory for depth_loss.3']
    %8 = vsyncpa [#allocation4], 0
    // Predicated region
    $region2: #{depth_loss.3} parent=1 // pred_check
      _
    $region3: #{depth_loss.3} parent=1 // pred_check_branch
      %10 = sbr.rel (0) target = $region5
    $region4: #{depth_loss.3} parent=1 // pred_region
      %s12 = ssub.s32 16, 16
      %13 = vsyncadd [#allocation4], %s12
      %s15 = sshll.u32 %s0, 4
      %s16 = int_to_ptr.vmem [resolvable:$true] %s15
      %18 = dma.vmem_to_smem %s16, 16, [#allocation3], [#allocation4]
    $region5: #{depth_loss.3} parent=1 // pred_fallthru
      _
    // Predicated region
    $region6: #{depth_loss.3} parent=1 // pred_check
      _
    $region7: #{depth_loss.3} parent=1 // pred_check_branch
      %20 = sbr.rel (0) target = $region9
    $region8: #{depth_loss.3} parent=1 // pred_region
      %s21 = sadd.s32 0, 0
      %p22 = scmp.lt.s32.totalorder %s21, 0
      %s23 = scalar_select %p22, %s21, 0
      %p24 = scmp.lt.s32.totalorder %s23, 0
      %s25 = scalar_select %p24, %s23, 0
      %s26 = smul.addr %s25, 8
      %s27 = scalar_lea.vmem %s1, %s26
      %s28 = sadd.s32 0, 0
      %p29 = scmp.lt.s32.totalorder %s28, 0
      %s30 = scalar_select %p29, %s28, 0
    $region9: #{depth_loss.3} parent=1 // pred_fallthru
      _
    // Predicated region
    $region10: #{depth_loss.3} parent=1 // pred_check
      _
    $region11: #{depth_loss.3} parent=1 // pred_check_branch
      %32 = sbr.rel (0) target = $region13
    $region12: #{depth_loss.3} parent=1 // pred_region
      %s33 = sadd.s32 0, 0
      %p34 = scmp.lt.s32.totalorder %s33, 0
      %s35 = scalar_select %p34, %s33, 0
      %p36 = scmp.lt.s32.totalorder %s35, 0
      %s37 = scalar_select %p36, %s35, 0
      %s38 = smul.addr %s37, 8
      %s39 = scalar_lea.vmem %s2, %s38
      %s40 = sadd.s32 0, 0
      %p41 = scmp.lt.s32.totalorder %s40, 0
      %s42 = scalar_select %p41, %s40, 0
    $region13: #{depth_loss.3} parent=1 // pred_fallthru
      _
    // Predicated region
    $region14: #{depth_loss.3} parent=1 // pred_check
      _
    $region15: #{depth_loss.3} parent=1 // pred_check_branch
      %44 = sbr.rel (0) target = $region17
    $region16: #{depth_loss.3} parent=1 // pred_region
      %45 = dma.done [#allocation4], 16
    $region17: #{depth_loss.3} parent=1 // pred_fallthru
      _
    %46 = sfence
    %s47 = sadd.s32 0, 0
    %p48 = scmp.lt.s32.totalorder %s47, 0
    %s49 = scalar_select %p48, %s47, 0
    %p50 = scmp.lt.s32.totalorder %s49, 0
    %s51 = scalar_select %p50, %s49, 0
    %s52 = smul.addr %s51, 8
    %s53 = scalar_lea.vmem %s1, %s52
    %s54 = sadd.s32 0, 0
    %p55 = scmp.lt.s32.totalorder %s54, 0
    %s56 = scalar_select %p55, %s54, 0
    %p57 = scmp.lt.s32.totalorder %s56, 0
    %s58 = scalar_select %p57, %s56, 0
    %s59 = smul.addr %s58, 8
    %s60 = scalar_lea.vmem %s2, %s59
    %s61 = sadd.s32 0, 0
    %p62 = scmp.lt.s32.totalorder %s61, 0
    %s63 = scalar_select %p62, %s61, 0
    %p64 = scmp.lt.s32.totalorder %s63, 0
    %s65 = scalar_select %p64, %s63, 0
    %s66 = smul.addr %s65, 8
    %s67 = scalar_lea.vmem %s1, %s66
    %s68 = sadd.s32 0, 0
    %p69 = scmp.lt.s32.totalorder %s68, 0
    %s70 = scalar_select %p69, %s68, 0
    %s71 = sadd.s32 0, 0
    %p72 = scmp.lt.s32.totalorder %s71, 0
    %s73 = scalar_select %p72, %s71, 0
    %p74 = scmp.lt.s32.totalorder %s73, 0
    %s75 = scalar_select %p74, %s73, 0
    %s76 = smul.addr %s75, 8
    %s77 = scalar_lea.vmem %s2, %s76
    %s78 = sadd.s32 0, 0
    %p79 = scmp.lt.s32.totalorder %s78, 0
    %s80 = scalar_select %p79, %s78, 0
    %p81 = scmp.eq.s32.totalorder 0, 0
    // Predicated region
    $region18: #{depth_loss.3} parent=1 // pred_check
      %p82 = pneg %p81
    $region19: #{depth_loss.3} parent=1 // pred_check_branch
      %84 = sbr.rel (%p82) target = $region21
    $region20: #{depth_loss.3} parent=1 // pred_region
      %85 = vst [vmem:[#allocation2] sm:$0xff] 0.0
    $region21: #{depth_loss.3} parent=1 // pred_fallthru
      _
    %v86 = vld [vmem:[%s67] sm:$0xff]
    %v87 = vld [vmem:[%s77] sm:$0xff]
    %v88 = vsub.f32 %v86, %v87
    %v89 = vand.u32 2147483647, %v88
    %s90 = sld [smem:[#allocation3]]
    %s91 = sld [smem:[#allocation3 + $0x1]]
    %s92 = sld [smem:[#allocation3 + $0x2]]
    %v93 = vld [vmem:[#allocation2] sm:$0xff]
    %v94 = vstv %s90
    %vm95 = vcmp.le.f32.partialorder %v89, %v94
    %v96 = vmul.f32 %v89, %v89
    %v97 = vstv %s91
    %v98 = vadd.f32 %v96, %v97
    %v99 = vstv %s92
    %v100 = vmul.f32 %v98, %v99
    %v101 = vsel %vm95, %v89, %v100
    %v102 = vadd.f32 %v93, %v101
    %103 = vst [vmem:[#allocation2] sm:$0xff] %v102
    // Predicated region
    $region22: #{depth_loss.3} parent=1 // pred_check
      %p104 = pneg %p81
    $region23: #{depth_loss.3} parent=1 // pred_check_branch
      %106 = sbr.rel (%p104) target = $region25
    $region24: #{depth_loss.3} parent=1 // pred_region
      %v107 = vld [vmem:[#allocation2] sm:$0xff]
      %v108 = vrot.slane %v107, 4
      %v109 = vadd.f32 %v107, %v108
      %v110 = vrot.slane %v109, 2
      %v111 = vadd.f32 %v109, %v110
      %v112 = vrot.slane %v111, 1
      %v113 = vadd.f32 %v111, %v112
      %114 = vst [vmem:[%s3] sm:$0xff] %v113
    $region25: #{depth_loss.3} parent=1 // pred_fallthru
      _
    // Predicated region
    $region26: #{depth_loss.3} parent=1 // pred_check
      _
    $region27: #{depth_loss.3} parent=1 // pred_check_branch
      %116 = sbr.rel (0) target = $region29
    $region28: #{depth_loss.3} parent=1 // pred_region
      _
    $region29: #{depth_loss.3} parent=1 // pred_fallthru
      _
    // Predicated region
    $region30: #{depth_loss.3} parent=1 // pred_check
      _
    $region31: #{depth_loss.3} parent=1 // pred_check_branch
      %118 = sbr.rel (0) target = $region33
    $region32: #{depth_loss.3} parent=1 // pred_region
      _
    $region33: #{depth_loss.3} parent=1 // pred_fallthru
      _
    %119 = vsyncpa [#allocation4], 1

</llo_original>
